<compile_context>
chip_gen: v7x
topology: tpu7x:2x2x1
jax: 0.10.0
libtpu: 0.0.40
codegen_flags: <defaults>
</compile_context>

<pallas_src>
import jax
import jax.numpy as jnp
from jax import lax
from jax.experimental import pallas as pl
from jax.experimental.pallas import tpu as pltpu


def _attention_kernel(xq_ref, xkv_ref, wqkv_ref, wp_ref, bp_ref, o_ref, acc_ref):
    """One (batch, query-tile, head) grid step.

    xq_ref  : (1, TQ, C)      query rows of x            (compute dtype)
    xkv_ref : (1, N,  C)      full sequence of x         (compute dtype)
    wqkv_ref: (1, C, 3*hd)    per-head fused [q|k|v] weights (q pre-scaled)
    wp_ref  : (1, hd, C)      per-head slice of the output projection
    bp_ref  : (1, C)          output projection bias (f32)
    o_ref   : (1, TQ, C)      output block
    acc_ref : (TQ, C) f32     per-(b, q-tile) accumulator over heads
    """
    h = pl.program_id(2)
    tq = xq_ref.shape[1]
    n = xkv_ref.shape[1]
    hd = wp_ref.shape[1]

    @pl.when(h == 0)
    def _init():
        # initialize accumulator with the projection bias
        acc_ref[...] = jnp.broadcast_to(bp_ref[...].astype(jnp.float32),
                                        acc_ref.shape)

    wqkv = wqkv_ref[0]               # (C, 3*hd)
    mxu_dtype = wqkv.dtype

    if tq == n:
        # single fused, lane-dense (N, 3*hd) QKV projection for this head
        qkv = jnp.dot(xq_ref[0], wqkv, preferred_element_type=jnp.float32)
        q = qkv[:, :hd]              # scale already folded into the weights
        k = qkv[:, hd:2 * hd]
        v = qkv[:, 2 * hd:]
    else:
        # query tile only needs its own rows for Q; K/V use the full sequence
        q = jnp.dot(xq_ref[0], wqkv[:, :hd],
                    preferred_element_type=jnp.float32)        # (TQ, hd)
        kv = jnp.dot(xkv_ref[0], wqkv[:, hd:],
                     preferred_element_type=jnp.float32)       # (N, 2*hd)
        k = kv[:, :hd]
        v = kv[:, hd:]

    # attention scores: contract the head_dim of q and k (no explicit .T)
    s = lax.dot_general(q.astype(mxu_dtype), k.astype(mxu_dtype),
                        (((1,), (1,)), ((), ())),
                        preferred_element_type=jnp.float32)     # (TQ, N)

    # numerically-stable softmax, all elementwise math in f32
    s = s - jnp.max(s, axis=-1, keepdims=True)
    p = jnp.exp(s)
    inv = pl.reciprocal(jnp.sum(p, axis=-1, keepdims=True), approx=True)
    p = p * inv

    ho = jnp.dot(p.astype(mxu_dtype), v.astype(mxu_dtype),
                 preferred_element_type=jnp.float32)            # (TQ, hd)

    # per-head output projection, accumulated over the head grid axis
    acc_ref[...] += jnp.dot(ho.astype(mxu_dtype), wp_ref[0],
                            preferred_element_type=jnp.float32)  # (TQ, C)

    @pl.when(h == pl.num_programs(2) - 1)
    def _done():
        o_ref[0] = acc_ref[...].astype(o_ref.dtype)


def _pick_q_block(n):
    """Query-tile size: whole sequence for small N, 128/256-row tiles for large N."""
    if n <= 512:
        return n
    for t in (256, 128, 64):
        if n % t == 0:
            return t
    return n


def attention_forward(x, qkv_weight, proj_weight, proj_bias, *, num_heads,
                      compute_dtype=jnp.bfloat16, q_block=None):
    """x: (B, N, C); qkv_weight: (3C, C) [PyTorch layout]; proj_weight: (C, C); proj_bias: (C,)."""
    B, N, C = x.shape
    hd = C // num_heads
    scale = hd ** (-0.5)

    # --- weight prep (trace-time glue) -------------------------------------
    # PyTorch: qkv = x @ W.T, output column j indexes (t, h, d) with
    # j = (t*H + h)*hd + d.  Build a per-head fused slab (H, C, 3*hd) with
    # columns ordered [q | k | v]; fold the softmax scale into the q columns.
    w = qkv_weight.reshape(3, num_heads, hd, C).transpose(1, 3, 0, 2)  # (H, C, 3, hd)
    w = w.reshape(num_heads, C, 3 * hd)
    w = w.at[:, :, :hd].multiply(scale)
    w_qkv = w.astype(compute_dtype)

    # out = ctx @ proj_weight.T + b, with ctx columns ordered (h, d)
    #     = sum_h  ho_h @ proj_weight.T[h*hd:(h+1)*hd, :]  + b
    w_proj = proj_weight.T.reshape(num_heads, hd, C).astype(compute_dtype)  # (H, hd, C)
    b_proj = proj_bias.reshape(1, C).astype(jnp.float32)

    x_c = x.astype(compute_dtype)

    if q_block is None:
        q_block = _pick_q_block(N)
    if N % q_block != 0:
        q_block = N
    n_q = N // q_block

    grid = (B, n_q, num_heads)

    # advisory cost estimate (flops: qkv proj + scores + p@v + out proj)
    itemsize_c = jnp.dtype(compute_dtype).itemsize
    flops = (2 * B * N * C * (3 * C)         # qkv projection
             + 4 * B * N * N * C             # q@k^T and p@v over all heads
             + 2 * B * N * C * C)            # output projection
    cost = pl.CostEstimate(
        flops=flops,
        transcendentals=B * num_heads * N * N,
        bytes_accessed=(2 * B * N * C * itemsize_c
                        + B * 4 * C * C * itemsize_c
                        + 4 * C
                        + B * N * C * jnp.dtype(x.dtype).itemsize),
    )

    return pl.pallas_call(
        _attention_kernel,
        out_shape=jax.ShapeDtypeStruct((B, N, C), x.dtype),
        grid_spec=pltpu.PrefetchScalarGridSpec(
            num_scalar_prefetch=0,
            grid=grid,
            in_specs=[
                pl.BlockSpec((1, q_block, C), lambda b, qi, h: (b, qi, 0)),  # x (query rows)
                pl.BlockSpec((1, N, C),       lambda b, qi, h: (b, 0, 0)),   # x (full seq for K/V)
                pl.BlockSpec((1, C, 3 * hd),  lambda b, qi, h: (h, 0, 0)),   # fused per-head qkv W
                pl.BlockSpec((1, hd, C),      lambda b, qi, h: (h, 0, 0)),   # per-head proj W
                pl.BlockSpec((1, C),          lambda b, qi, h: (0, 0)),      # proj bias
            ],
            out_specs=pl.BlockSpec((1, q_block, C), lambda b, qi, h: (b, qi, 0)),
            scratch_shapes=[pltpu.VMEM((q_block, C), jnp.float32)],
        ),
        compiler_params=pltpu.CompilerParams(
            dimension_semantics=("parallel", "parallel", "arbitrary")),
        cost_estimate=cost,
    )(x_c, x_c, w_qkv, w_proj, b_proj)


def attention_reference(x, qkv_weight, proj_weight, proj_bias, *, num_heads):
    """Pure-JAX f32 reference mirroring the PyTorch forward."""
    B, N, C = x.shape
    hd = C // num_heads
    scale = hd ** (-0.5)
    qkv = jnp.einsum('bnc,oc->bno', x, qkv_weight)                    # (B, N, 3C)
    qkv = qkv.reshape(B, N, 3, num_heads, hd).transpose(2, 0, 3, 1, 4)
    q, k, v = qkv[0], qkv[1], qkv[2]                                  # (B, H, N, hd)
    attn = jnp.einsum('bhnd,bhmd->bhnm', q, k) * scale
    attn = jax.nn.softmax(attn, axis=-1)
    out = jnp.einsum('bhnm,bhmd->bhnd', attn, v)
    out = out.transpose(0, 2, 1, 3).reshape(B, N, C)
    return jnp.einsum('bnc,oc->bno', out, proj_weight) + proj_bias


if __name__ == "__main__":
    B, N, C, H = 2, 8, 32, 4   # head_dim = 8
    key = jax.random.PRNGKey(0)
    kx, kqkv, kpw, kpb = jax.random.split(key, 4)

    x = jax.random.normal(kx, (B, N, C), dtype=jnp.float32)
    qkv_weight = 0.1 * jax.random.normal(kqkv, (3 * C, C), dtype=jnp.float32)  # qkv_bias=False
    proj_weight = 0.1 * jax.random.normal(kpw, (C, C), dtype=jnp.float32)
    proj_bias = 0.1 * jax.random.normal(kpb, (C,), dtype=jnp.float32)

    out = attention_forward(x, qkv_weight, proj_weight, proj_bias, num_heads=H)
    out = jax.block_until_ready(out)

    ref = attention_reference(x, qkv_weight, proj_weight, proj_bias, num_heads=H)
    assert out.shape == (B, N, C)
    # bf16 MXU operands + approx reciprocal -> loosened tolerance vs f32 reference
    assert jnp.allclose(out, ref, atol=2e-2, rtol=2e-2), "mismatch vs reference"

    print("KERNEL_OK")
</pallas_src>

<mosaic_0001>
module attributes {stable_mosaic.version = 11 : i64} {
  func.func @_attention_kernel(%arg0: i32, %arg1: i32, %arg2: i32, %arg3: memref<1x8x32xbf16, #tpu.memory_space<vmem>>, %arg4: memref<1x8x32xbf16, #tpu.memory_space<vmem>>, %arg5: memref<1x32x24xbf16, #tpu.memory_space<vmem>>, %arg6: memref<1x8x32xbf16, #tpu.memory_space<vmem>>, %arg7: memref<1x32xf32, #tpu.memory_space<vmem>>, %arg8: memref<1x8x32xf32, #tpu.memory_space<vmem>>, %arg9: memref<8x32xf32, #tpu.memory_space<vmem>>) attributes {dimension_semantics = [#tpu.dimension_semantics<parallel>, #tpu.dimension_semantics<parallel>, #tpu.dimension_semantics<arbitrary>], iteration_bounds = array<i64: 2, 1, 4>, scalar_prefetch = 0 : i64, scratch_operands = 1 : i64, tpu.core_type = #tpu.core_type<tc>, window_params = [{transform_indices = @transform_0, window_bounds = array<i64: 1, 8, 32>}, {transform_indices = @transform_1, window_bounds = array<i64: 1, 8, 32>}, {transform_indices = @transform_2, window_bounds = array<i64: 1, 32, 24>}, {transform_indices = @transform_3, window_bounds = array<i64: 1, 8, 32>}, {pipeline_mode = #tpu.pipeline_mode<synchronous>, transform_indices = @transform_4, window_bounds = array<i64: 1, 32>}, {transform_indices = @transform_5, window_bounds = array<i64: 1, 8, 32>}]} {
    %c0_i32 = arith.constant 0 : i32
    %0 = arith.cmpi eq, %arg2, %c0_i32 : i32
    %1 = arith.extui %0 : i1 to i32
    %c0_i32_0 = arith.constant 0 : i32
    %2 = arith.cmpi ne, %1, %c0_i32_0 : i32
    scf.if %2 {
      %c0_19 = arith.constant 0 : index
      %c0_20 = arith.constant 0 : index
      %37 = vector.load %arg7[%c0_19, %c0_20] : memref<1x32xf32, #tpu.memory_space<vmem>>, vector<1x32xf32>
      %38 = vector.shape_cast %37 : vector<1x32xf32> to vector<1x32xf32>
      %39 = vector.broadcast %38 : vector<1x32xf32> to vector<8x32xf32>
      %c0_21 = arith.constant 0 : index
      %c0_22 = arith.constant 0 : index
      %40 = vector.load %arg9[%c0_21, %c0_22] : memref<8x32xf32, #tpu.memory_space<vmem>>, vector<8x32xf32>
      tpu.vector_store %arg9[%c0_21, %c0_22], %39 {strides = array<i32>} : memref<8x32xf32, #tpu.memory_space<vmem>>, vector<8x32xf32>,
    } else {
    }
    %c0 = arith.constant 0 : index
    %c0_1 = arith.constant 0 : index
    %c0_2 = arith.constant 0 : index
    %3 = vector.load %arg5[%c0, %c0_1, %c0_2] : memref<1x32x24xbf16, #tpu.memory_space<vmem>>, vector<1x32x24xbf16>
    %4 = vector.shape_cast %3 : vector<1x32x24xbf16> to vector<32x24xbf16>
    %c0_3 = arith.constant 0 : index
    %c0_4 = arith.constant 0 : index
    %c0_5 = arith.constant 0 : index
    %5 = vector.load %arg3[%c0_3, %c0_4, %c0_5] : memref<1x8x32xbf16, #tpu.memory_space<vmem>>, vector<1x8x32xbf16>
    %6 = vector.shape_cast %5 : vector<1x8x32xbf16> to vector<8x32xbf16>
    %cst = arith.constant dense<0.000000e+00> : vector<8x24xf32>
    %7 = tpu.matmul %6, %4, %cst {dimension_numbers = #tpu.dot_dimension_numbers<[1], [0], [0], [1], [0, 0, 1, 1], [], []>} : vector<8x32xbf16>, vector<32x24xbf16>, vector<8x24xf32> -> vector<8x24xf32>
    %8 = vector.extract_strided_slice %7 {offsets = [0, 0], sizes = [8, 8], strides = [1, 1]} : vector<8x24xf32> to vector<8x8xf32>
    %9 = vector.extract_strided_slice %7 {offsets = [0, 8], sizes = [8, 8], strides = [1, 1]} : vector<8x24xf32> to vector<8x8xf32>
    %10 = vector.extract_strided_slice %7 {offsets = [0, 16], sizes = [8, 8], strides = [1, 1]} : vector<8x24xf32> to vector<8x8xf32>
    %11 = arith.truncf %8 : vector<8x8xf32> to vector<8x8xbf16>
    %12 = arith.truncf %9 : vector<8x8xf32> to vector<8x8xbf16>
    %cst_6 = arith.constant dense<0.000000e+00> : vector<8x8xf32>
    %13 = tpu.matmul %11, %12, %cst_6 {dimension_numbers = #tpu.dot_dimension_numbers<[1], [1], [0], [0], [0, 0, 1, 0], [], []>} : vector<8x8xbf16>, vector<8x8xbf16>, vector<8x8xf32> -> vector<8x8xf32>
    %cst_7 = arith.constant dense<0xFF800000> : vector<8xf32>
    %14 = vector.multi_reduction <maximumf>, %13, %cst_7 [1] : vector<8x8xf32> to vector<8xf32>
    %15 = vector.shape_cast %14 : vector<8xf32> to vector<8x1xf32>
    %16 = vector.broadcast %15 : vector<8x1xf32> to vector<8x8xf32>
    %17 = arith.subf %13, %16 : vector<8x8xf32>
    %18 = math.exp %17 : vector<8x8xf32>
    %cst_8 = arith.constant dense<0.000000e+00> : vector<8xf32>
    %19 = vector.multi_reduction <add>, %18, %cst_8 [1] : vector<8x8xf32> to vector<8xf32>
    %20 = vector.shape_cast %19 : vector<8xf32> to vector<8x1xf32>
    %21 = tpu.reciprocal %20 {approx = true} : vector<8x1xf32> -> vector<8x1xf32>
    %22 = vector.broadcast %21 : vector<8x1xf32> to vector<8x8xf32>
    %23 = arith.mulf %18, %22 : vector<8x8xf32>
    %24 = arith.truncf %23 : vector<8x8xf32> to vector<8x8xbf16>
    %25 = arith.truncf %10 : vector<8x8xf32> to vector<8x8xbf16>
    %cst_9 = arith.constant dense<0.000000e+00> : vector<8x8xf32>
    %26 = tpu.matmul %24, %25, %cst_9 {dimension_numbers = #tpu.dot_dimension_numbers<[1], [0], [0], [1], [0, 0, 1, 1], [], []>} : vector<8x8xbf16>, vector<8x8xbf16>, vector<8x8xf32> -> vector<8x8xf32>
    %c0_10 = arith.constant 0 : index
    %c0_11 = arith.constant 0 : index
    %27 = vector.load %arg9[%c0_10, %c0_11] : memref<8x32xf32, #tpu.memory_space<vmem>>, vector<8x32xf32>
    %28 = arith.truncf %26 : vector<8x8xf32> to vector<8x8xbf16>
    %c0_12 = arith.constant 0 : index
    %c0_13 = arith.constant 0 : index
    %c0_14 = arith.constant 0 : index
    %29 = vector.load %arg6[%c0_12, %c0_13, %c0_14] : memref<1x8x32xbf16, #tpu.memory_space<vmem>>, vector<1x8x32xbf16>
    %30 = vector.shape_cast %29 : vector<1x8x32xbf16> to vector<8x32xbf16>
    %cst_15 = arith.constant dense<0.000000e+00> : vector<8x32xf32>
    %31 = tpu.matmul %28, %30, %cst_15 {dimension_numbers = #tpu.dot_dimension_numbers<[1], [0], [0], [1], [0, 0, 1, 1], [], []>} : vector<8x8xbf16>, vector<8x32xbf16>, vector<8x32xf32> -> vector<8x32xf32>
    %32 = arith.addf %27, %31 : vector<8x32xf32>
    %c0_16 = arith.constant 0 : index
    %c0_17 = arith.constant 0 : index
    %33 = vector.load %arg9[%c0_16, %c0_17] : memref<8x32xf32, #tpu.memory_space<vmem>>, vector<8x32xf32>
    tpu.vector_store %arg9[%c0_16, %c0_17], %32 {strides = array<i32>} : memref<8x32xf32, #tpu.memory_space<vmem>>, vector<8x32xf32>,
    %c3_i32 = arith.constant 3 : i32
    %34 = arith.cmpi eq, %arg2, %c3_i32 : i32
    %35 = arith.extui %34 : i1 to i32
    %c0_i32_18 = arith.constant 0 : i32
    %36 = arith.cmpi ne, %35, %c0_i32_18 : i32
    scf.if %36 {
      %c0_19 = arith.constant 0 : index
      %c0_20 = arith.constant 0 : index
      %37 = vector.load %arg9[%c0_19, %c0_20] : memref<8x32xf32, #tpu.memory_space<vmem>>, vector<8x32xf32>
      %c0_21 = arith.constant 0 : index
      %c0_22 = arith.constant 0 : index
      %c0_23 = arith.constant 0 : index
      %38 = vector.load %arg8[%c0_21, %c0_22, %c0_23] : memref<1x8x32xf32, #tpu.memory_space<vmem>>, vector<1x8x32xf32>
      %39 = vector.shape_cast %38 : vector<1x8x32xf32> to vector<8x32xf32>
      %40 = vector.shape_cast %37 : vector<8x32xf32> to vector<1x8x32xf32>
      tpu.vector_store %arg8[%c0_21, %c0_22, %c0_23], %40 {strides = array<i32>} : memref<1x8x32xf32, #tpu.memory_space<vmem>>, vector<1x8x32xf32>,
    } else {
    }
    return
  }
  func.func @transform_0(%arg0: i32, %arg1: i32, %arg2: i32) -> (i32, i32, i32) {
    %c0_i32 = arith.constant 0 : i32
    %c0_i32_0 = arith.constant 0 : i32
    return %arg0, %arg1, %c0_i32 : i32, i32, i32
  }
  func.func @transform_1(%arg0: i32, %arg1: i32, %arg2: i32) -> (i32, i32, i32) {
    %c0_i32 = arith.constant 0 : i32
    %c0_i32_0 = arith.constant 0 : i32
    %c0_i32_1 = arith.constant 0 : i32
    return %arg0, %c0_i32, %c0_i32_0 : i32, i32, i32
  }
  func.func @transform_2(%arg0: i32, %arg1: i32, %arg2: i32) -> (i32, i32, i32) {
    %c0_i32 = arith.constant 0 : i32
    %c0_i32_0 = arith.constant 0 : i32
    %c0_i32_1 = arith.constant 0 : i32
    return %arg2, %c0_i32, %c0_i32_0 : i32, i32, i32
  }
  func.func @transform_3(%arg0: i32, %arg1: i32, %arg2: i32) -> (i32, i32, i32) {
    %c0_i32 = arith.constant 0 : i32
    %c0_i32_0 = arith.constant 0 : i32
    %c0_i32_1 = arith.constant 0 : i32
    return %arg2, %c0_i32, %c0_i32_0 : i32, i32, i32
  }
  func.func @transform_4(%arg0: i32, %arg1: i32, %arg2: i32) -> (i32, i32) {
    %c0_i32 = arith.constant 0 : i32
    %c0_i32_0 = arith.constant 0 : i32
    %c0_i32_1 = arith.constant 0 : i32
    return %c0_i32, %c0_i32_0 : i32, i32
  }
  func.func @transform_5(%arg0: i32, %arg1: i32, %arg2: i32) -> (i32, i32, i32) {
    %c0_i32 = arith.constant 0 : i32
    %c0_i32_0 = arith.constant 0 : i32
    return %arg0, %arg1, %c0_i32 : i32, i32, i32
  }
}

</mosaic_0001>

<llo_original>
// kernel: tpu_custom_call.1
$region0: #{tpu_custom_call.1}
  #allocation0 [shape = 'u32[]', space=smem, size = 0x4, offset = 0x4, fixed_abs, tag = 'smem constant byte address 0x4 - core index']
  #allocation1 [shape = 'u32[144,128]{1,0:T(1,128)}', space=vmem, size = 0x12000, scoped, tag = 'internal scratch']
  #allocation2 [shape = 'f32[8,32]{1,0:T(8,128)}', space=vmem, size = 0x1000, scoped, tag = 'scratch operand']
  %s0 = inlined_call_operand.vmem [shape: bf16[2,8,32], index: 0, kind: input, shape index: {}]
  %s1 = inlined_call_operand.vmem [shape: bf16[2,8,32], index: 1, kind: input, shape index: {}]
  %s2 = inlined_call_operand.vmem [shape: bf16[4,32,24], index: 2, kind: input, shape index: {}]
  %s3 = inlined_call_operand.vmem [shape: bf16[4,8,32], index: 3, kind: input, shape index: {}]
  %s4 = inlined_call_operand.vmem [shape: f32[1,32], index: 4, kind: input, shape index: {}]
  %s5 = inlined_call_operand.hbm [shape: f32[2,8,32], index: 5, kind: output, shape index: {}]
  %s6 = sld [smem:[#allocation0]]
  $region61: #{tpu_custom_call.1} parent=0
    _
  %s8 = ssub.s32 1, %s6
  %s9 = scalar_select 0, %s8, %s6
  $region1: #{tpu_custom_call.1} parent=0
    #allocation3 [shape = 'u8[8192]{0}', space=vmem, size = 0x2000, scoped, tag = 'output window, operand 0']
    #allocation4 [shape = 's32[2]{0}', space=sflag, size = 0x8, scoped, tag = 'scoped memory for tpu_custom_call.1']
    %10 = vsyncpa [#allocation4], 0
    %s11 = scalar_lea.sflag [#allocation4], 1
    %12 = vsyncpa %s11, 0
    loop: start=0, step=1, limit=10
    $region2: #{tpu_custom_call.1} parent=1 // loop_pre_header
      _
    $region3: #{tpu_custom_call.1} parent=1 // loop_header
      %s14 = sphi 0, %s18
      %p15 = scmp.ge.s32.totalorder %s14, 10
      %s21 = sphi 0, %s40
      %s22 = sphi 0, %s36
      %s23 = sphi 0, %s32
      %s24 = sphi 0, %s21
      %s25 = sphi 0, %s22
      %s26 = sphi 0, %s23
      %s27 = sphi 0, %s24
      %s28 = sphi 0, %s25
      %s29 = sphi 0, %s26
      %s45 = sphi 0, %s47
      %s48 = sphi 0, %s45
      %s49 = sphi 0, %s48
      %s65 = sphi 0, %s49
      %s71 = sphi 0, %s73
      %s74 = sphi 0, %s71
      %s75 = sphi 0, %s74
      %s91 = sphi 0, %s75
      %s97 = sphi 0, %s99
      %s100 = sphi 0, %s97
      %s101 = sphi 0, %s100
      %s117 = sphi 0, %s101
      %s123 = sphi 0, %s125
      %s126 = sphi 0, %s123
      %s127 = sphi 0, %s126
      %s143 = sphi 0, %s127
      %s147 = sphi 0, %s147
      %s149 = sphi 0, %s147
      %s150 = sphi 0, %s149
      %s164 = sphi 0, %s150
      %s172 = sphi 0, %s174
      %s175 = sphi 0, %s172
      %s176 = sphi 0, %s175
      %s192 = sphi 0, %s176
    $region4: #{tpu_custom_call.1} parent=1 // loop_header_branch
      %17 = sbr.rel (%p15) target = $region8
    $region5: #{tpu_custom_call.1} parent=1 // loop_body
      %s19 = ssub.s32 %s14, 1
      %s20 = ssub.s32 %s14, 2
      %s30 = sadd.s32 1, %s23
      %p31 = scmp.ge.s32.totalorder %s30, 4
      %s32 = scalar_select %p31, 0, %s30
      %s33 = sadd.s32 1, %s22
      %s34 = scalar_select %p31, %s33, %s22
      %p35 = scmp.ge.s32.totalorder %s34, 1
      %s36 = scalar_select %p35, 0, %s34
      %s37 = sadd.s32 1, %s21
      %s38 = scalar_select %p35, %s37, %s21
      %p39 = scmp.ge.s32.totalorder %s38, 2
      %s40 = scalar_select %p39, 0, %s38
      %s41 = ssub.s32 %s21, %s40
      %s42 = ssub.s32 %s22, %s36
      %s43 = sor.u32 %s41, %s42
      %p44 = scmp.eq.s32.totalorder %s43, 0
      %s46 = sadd.s32 %s45, 1
      %s47 = scalar_select %p44, %s45, %s46
      %p50 = pneg %p44
      %p51 = scmp.eq.s32.totalorder %s14, 7
      %p52 = por %p50, %p51
      %p53 = scmp.ne.s32.totalorder %s45, %s48
      %p54 = scmp.eq.s32.totalorder %s14, 0
      %p55 = por %p53, %p54
      %p56 = scmp.ne.s32.totalorder %s45, %s48
      %p57 = scmp.eq.s32.totalorder %s19, 7
      %p58 = por %p56, %p57
      %p59 = scmp.ne.s32.totalorder %s48, %s49
      %p60 = scmp.eq.s32.totalorder %s19, 0
      %p61 = por %p59, %p60
      %p62 = scmp.ne.s32.totalorder %s48, %s49
      %p63 = scmp.eq.s32.totalorder %s20, 7
      %p64 = por %p62, %p63
      %p66 = scmp.ne.s32.totalorder %s49, %s65
      %p67 = scmp.eq.s32.totalorder %s20, 0
      %p68 = por %p66, %p67
      %s69 = ssub.s32 %s21, %s40
      %p70 = scmp.eq.s32.totalorder %s69, 0
      %s72 = sadd.s32 %s71, 1
      %s73 = scalar_select %p70, %s71, %s72
      %p76 = pneg %p70
      %p77 = scmp.eq.s32.totalorder %s14, 7
      %p78 = por %p76, %p77
      %p79 = scmp.ne.s32.totalorder %s71, %s74
      %p80 = scmp.eq.s32.totalorder %s14, 0
      %p81 = por %p79, %p80
      %p82 = scmp.ne.s32.totalorder %s71, %s74
      %p83 = scmp.eq.s32.totalorder %s19, 7
      %p84 = por %p82, %p83
      %p85 = scmp.ne.s32.totalorder %s74, %s75
      %p86 = scmp.eq.s32.totalorder %s19, 0
      %p87 = por %p85, %p86
      %p88 = scmp.ne.s32.totalorder %s74, %s75
      %p89 = scmp.eq.s32.totalorder %s20, 7
      %p90 = por %p88, %p89
      %p92 = scmp.ne.s32.totalorder %s75, %s91
      %p93 = scmp.eq.s32.totalorder %s20, 0
      %p94 = por %p92, %p93
      %s95 = ssub.s32 %s23, %s32
      %p96 = scmp.eq.s32.totalorder %s95, 0
      %s98 = sadd.s32 %s97, 1
      %s99 = scalar_select %p96, %s97, %s98
      %p102 = pneg %p96
      %p103 = scmp.eq.s32.totalorder %s14, 7
      %p104 = por %p102, %p103
      %p105 = scmp.ne.s32.totalorder %s97, %s100
      %p106 = scmp.eq.s32.totalorder %s14, 0
      %p107 = por %p105, %p106
      %p108 = scmp.ne.s32.totalorder %s97, %s100
      %p109 = scmp.eq.s32.totalorder %s19, 7
      %p110 = por %p108, %p109
      %p111 = scmp.ne.s32.totalorder %s100, %s101
      %p112 = scmp.eq.s32.totalorder %s19, 0
      %p113 = por %p111, %p112
      %p114 = scmp.ne.s32.totalorder %s100, %s101
      %p115 = scmp.eq.s32.totalorder %s20, 7
      %p116 = por %p114, %p115
      %p118 = scmp.ne.s32.totalorder %s101, %s117
      %p119 = scmp.eq.s32.totalorder %s20, 0
      %p120 = por %p118, %p119
      %s121 = ssub.s32 %s23, %s32
      %p122 = scmp.eq.s32.totalorder %s121, 0
      %s124 = sadd.s32 %s123, 1
      %s125 = scalar_select %p122, %s123, %s124
      %p128 = pneg %p122
      %p129 = scmp.eq.s32.totalorder %s14, 7
      %p130 = por %p128, %p129
      %p131 = scmp.ne.s32.totalorder %s123, %s126
      %p132 = scmp.eq.s32.totalorder %s14, 0
      %p133 = por %p131, %p132
      %p134 = scmp.ne.s32.totalorder %s123, %s126
      %p135 = scmp.eq.s32.totalorder %s19, 7
      %p136 = por %p134, %p135
      %p137 = scmp.ne.s32.totalorder %s126, %s127
      %p138 = scmp.eq.s32.totalorder %s19, 0
      %p139 = por %p137, %p138
      %p140 = scmp.ne.s32.totalorder %s126, %s127
      %p141 = scmp.eq.s32.totalorder %s20, 7
      %p142 = por %p140, %p141
      %p144 = scmp.ne.s32.totalorder %s127, %s143
      %p145 = scmp.eq.s32.totalorder %s20, 0
      %p146 = por %p144, %p145
      %s148 = sadd.s32 %s147, 1
      %p151 = scmp.eq.s32.totalorder %s14, 7
      %p152 = scmp.ne.s32.totalorder %s147, %s149
      %p153 = scmp.eq.s32.totalorder %s14, 0
      %p154 = por %p152, %p153
      %p155 = scmp.ne.s32.totalorder %s147, %s149
      %p156 = scmp.eq.s32.totalorder %s19, 7
      %p157 = por %p155, %p156
      %p158 = scmp.ne.s32.totalorder %s149, %s150
      %p159 = scmp.eq.s32.totalorder %s19, 0
      %p160 = por %p158, %p159
      %p161 = scmp.ne.s32.totalorder %s149, %s150
      %p162 = scmp.eq.s32.totalorder %s20, 7
      %p163 = por %p161, %p162
      %p165 = scmp.ne.s32.totalorder %s150, %s164
      %p166 = scmp.eq.s32.totalorder %s20, 0
      %p167 = por %p165, %p166
      %s168 = ssub.s32 %s21, %s40
      %s169 = ssub.s32 %s22, %s36
      %s170 = sor.u32 %s168, %s169
      %p171 = scmp.eq.s32.totalorder %s170, 0
      %s173 = sadd.s32 %s172, 1
      %s174 = scalar_select %p171, %s172, %s173
      %p177 = pneg %p171
      %p178 = scmp.eq.s32.totalorder %s14, 7
      %p179 = por %p177, %p178
      %p180 = scmp.ne.s32.totalorder %s172, %s175
      %p181 = scmp.eq.s32.totalorder %s14, 0
      %p182 = por %p180, %p181
      %p183 = scmp.ne.s32.totalorder %s172, %s175
      %p184 = scmp.eq.s32.totalorder %s19, 7
      %p185 = por %p183, %p184
      %p186 = scmp.ne.s32.totalorder %s175, %s176
      %p187 = scmp.eq.s32.totalorder %s19, 0
      %p188 = por %p186, %p187
      %p189 = scmp.ne.s32.totalorder %s175, %s176
      %p190 = scmp.eq.s32.totalorder %s20, 7
      %p191 = por %p189, %p190
      %p193 = scmp.ne.s32.totalorder %s176, %s192
      %p194 = scmp.eq.s32.totalorder %s20, 0
      %p195 = por %p193, %p194
      %p196 = scmp.le.s32.totalorder 1, %s14
      %p197 = scmp.lt.s32.totalorder %s14, 9
      %p198 = pnand %p196, %p197
      %p199 = pneg %p198
      // Predicated region
      $region9: #{tpu_custom_call.1} parent=5 // pred_check
        _
      $region10: #{tpu_custom_call.1} parent=5 // pred_check_branch
        %201 = sbr.rel (%p198) target = $region12
      $region11: #{tpu_custom_call.1} parent=5 // pred_region
        %s202 = ssub.s32 %s14, 1
        // Predicated region
        $region13: #{tpu_custom_call.1} parent=11 // pred_check
          %p203 = pneg %p160
        $region14: #{tpu_custom_call.1} parent=11 // pred_check_branch
          %205 = sbr.rel (%p203) target = $region16
        $region15: #{tpu_custom_call.1} parent=11 // pred_region
          _
        $region16: #{tpu_custom_call.1} parent=11 // pred_fallthru
          _
      $region12: #{tpu_custom_call.1} parent=5 // pred_fallthru
        _
      %p206 = scmp.lt.s32.totalorder %s14, 8
      // Predicated region
      $region17: #{tpu_custom_call.1} parent=5 // pred_check
        %p207 = pneg %p206
      $region18: #{tpu_custom_call.1} parent=5 // pred_check_branch
        %209 = sbr.rel (%p207) target = $region20
      $region19: #{tpu_custom_call.1} parent=5 // pred_region
        // Predicated region
        $region21: #{tpu_custom_call.1} parent=19 // pred_check
          %p210 = pneg %p55
        $region22: #{tpu_custom_call.1} parent=19 // pred_check_branch
          %212 = sbr.rel (%p210) target = $region24
        $region23: #{tpu_custom_call.1} parent=19 // pred_region
          %p213 = scmp.lt.s32.totalorder %s21, 1
          %s214 = scalar_select %p213, %s21, 1
          %p215 = scmp.lt.s32.totalorder %s22, 0
          %s216 = scalar_select %p215, %s22, 0
          %s217 = sadd.s32 %s216, %s214
          %s218 = smul.addr %s217, 4
          %s219 = scalar_lea.vmem %s0, %s218
        $region24: #{tpu_custom_call.1} parent=19 // pred_fallthru
          _
        // Predicated region
        $region25: #{tpu_custom_call.1} parent=19 // pred_check
          %p220 = pneg %p81
        $region26: #{tpu_custom_call.1} parent=19 // pred_check_branch
          %222 = sbr.rel (%p220) target = $region28
        $region27: #{tpu_custom_call.1} parent=19 // pred_region
          %p223 = scmp.lt.s32.totalorder %s21, 1
          %s224 = scalar_select %p223, %s21, 1
          %s225 = smul.addr %s224, 4
          %s226 = scalar_lea.vmem %s1, %s225
        $region28: #{tpu_custom_call.1} parent=19 // pred_fallthru
          _
        // Predicated region
        $region29: #{tpu_custom_call.1} parent=19 // pred_check
          %p227 = pneg %p107
        $region30: #{tpu_custom_call.1} parent=19 // pred_check_branch
          %229 = sbr.rel (%p227) target = $region32
        $region31: #{tpu_custom_call.1} parent=19 // pred_region
          %p230 = scmp.lt.s32.totalorder %s23, 3
          %s231 = scalar_select %p230, %s23, 3
          %s232 = smul.addr %s231, 4
          %s233 = smul.addr %s232, 4
          %s234 = scalar_lea.vmem %s2, %s233
        $region32: #{tpu_custom_call.1} parent=19 // pred_fallthru
          _
        // Predicated region
        $region33: #{tpu_custom_call.1} parent=19 // pred_check
          %p235 = pneg %p133
        $region34: #{tpu_custom_call.1} parent=19 // pred_check_branch
          %237 = sbr.rel (%p235) target = $region36
        $region35: #{tpu_custom_call.1} parent=19 // pred_region
          %p238 = scmp.lt.s32.totalorder %s23, 3
          %s239 = scalar_select %p238, %s23, 3
          %s240 = smul.addr %s239, 4
          %s241 = scalar_lea.vmem %s3, %s240
        $region36: #{tpu_custom_call.1} parent=19 // pred_fallthru
          _
      $region20: #{tpu_custom_call.1} parent=5 // pred_fallthru
        _
      %p242 = scmp.le.s32.totalorder 1, %s14
      %p243 = scmp.lt.s32.totalorder %s14, 9
      %p244 = pnand %p242, %p243
      %p245 = pneg %p244
      // Predicated region
      $region37: #{tpu_custom_call.1} parent=5 // pred_check
        _
      $region38: #{tpu_custom_call.1} parent=5 // pred_check_branch
        %247 = sbr.rel (%p244) target = $region40
      $region39: #{tpu_custom_call.1} parent=5 // pred_region
        %s248 = ssub.s32 %s14, 1
        %p249 = scmp.lt.s32.totalorder %s24, 1
        %s250 = scalar_select %p249, %s24, 1
        %p251 = scmp.lt.s32.totalorder %s25, 0
        %s252 = scalar_select %p251, %s25, 0
        %s253 = sadd.s32 %s252, %s250
        %s254 = smul.addr %s253, 4
        %s255 = scalar_lea.vmem %s0, %s254
        %p256 = pneg %p61
        %p257 = pneg %p58
        %p258 = scmp.lt.s32.totalorder %s24, 1
        %s259 = scalar_select %p258, %s24, 1
        %s260 = smul.addr %s259, 4
        %s261 = scalar_lea.vmem %s1, %s260
        %p262 = pneg %p87
        %p263 = pneg %p84
        %p264 = scmp.lt.s32.totalorder %s26, 3
        %s265 = scalar_select %p264, %s26, 3
        %s266 = smul.addr %s265, 4
        %s267 = smul.addr %s266, 4
        %s268 = scalar_lea.vmem %s2, %s267
        %p269 = pneg %p113
        %p270 = pneg %p110
        %p271 = scmp.lt.s32.totalorder %s26, 3
        %s272 = scalar_select %p271, %s26, 3
        %s273 = smul.addr %s272, 4
        %s274 = scalar_lea.vmem %s3, %s273
        %p275 = pneg %p139
        %p276 = pneg %p136
        %p277 = pneg %p160
        %p278 = pneg %p157
        %p279 = pneg %p188
        %p280 = pneg %p185
        %s281 = sand.u32 %s175, 1
        %s282 = scalar_lea.sflag [#allocation4], %s281
        %s283 = sand.u32 %s175, 1
        %s284 = smul.addr %s283, 8
        %s285 = scalar_lea.vmem [#allocation3], %s284
        %p286 = scmp.lt.s32.totalorder %s24, 1
        %s287 = scalar_select %p286, %s24, 1
        %p288 = scmp.lt.s32.totalorder %s25, 0
        %s289 = scalar_select %p288, %s25, 0
        %s290 = sadd.s32 %s289, %s287
        %s291 = smul.addr %s290, 4
        %s292 = scalar_lea.vmem %s0, %s291
        %p293 = scmp.lt.s32.totalorder %s24, 1
        %s294 = scalar_select %p293, %s24, 1
        %s295 = smul.addr %s294, 4
        %s296 = scalar_lea.vmem %s1, %s295
        %p297 = scmp.lt.s32.totalorder %s26, 3
        %s298 = scalar_select %p297, %s26, 3
        %s299 = smul.addr %s298, 4
        %s300 = smul.addr %s299, 4
        %s301 = scalar_lea.vmem %s2, %s300
        %p302 = scmp.lt.s32.totalorder %s26, 3
        %s303 = scalar_select %p302, %s26, 3
        %s304 = smul.addr %s303, 4
        %s305 = scalar_lea.vmem %s3, %s304
        %p307 = scmp.eq.s32.totalorder %s26, 0
        // Predicated region
        $region41: #{tpu_custom_call.1} parent=39 // pred_check
          %p308 = pneg %p307
        $region42: #{tpu_custom_call.1} parent=39 // pred_check_branch
          %310 = sbr.rel (%p308) target = $region44
        $region43: #{tpu_custom_call.1} parent=39 // pred_region
          %v311 = vld [vmem:[%s4] sm:$0x1]
          %v313 = vlaneseq
          %v314 = vshrl.u32 %v313, 7
          %v315 = vsub.s32 0, %v314
          %v316 = vrot.slane %v311, %v315
          %vm318 = vcmask 261120
          %319 = vst.msk [vmem:[#allocation2] sm:$0xff] %vm318, %v316
        $region44: #{tpu_custom_call.1} parent=39 // pred_fallthru
          _
        %v320 = vld [vmem:[%s301] sm:$0xf]
        %v321 = vld [vmem:[%s301 + $0x4] sm:$0xf]
        %v322 = vld [vmem:[%s301 + $0x8] sm:$0xf]
        %v323 = vld [vmem:[%s301 + $0xc] sm:$0xf]
        %v324 = vld [vmem:[%s292] sm:$0xf]
        %v329 = vunpack.c.l.b16 %v320
        %v330 = vunpack.c.l.b16 %v321
        %v331 = vunpack.c.l.b16 %v322
        %v332 = vunpack.c.l.b16 %v323
        %v333 = vpack.c.b16 %v330, %v329
        %v334 = vpack.c.b16 %v332, %v331
        %vm337 = vcmask 261120
        %v339 = vsel %vm337, %v324, 0
        %341 = vmatprep.subr.bf16.mxu0 0
        %342 = vmatpush1.bf16.msra.mxu0 %v333
        %343 = vmatprep.subr.bf16.mxu0 0
        %344 = vmatpush1.bf16.msra.mxu0 %v334
        %345 = vmatprep.subr.bf16.mxu0 0
        %346 = vmatpush1.bf16.msra.mxu0 0
        %347 = vmatprep.subr.bf16.mxu0 0
        %348 = vmatpush1.bf16.msra.mxu0 0
        %349 = vmatprep.subr.bf16.mxu0 0
        %350 = vmatpush1.bf16.msra.mxu0 0
        %351 = vmatprep.subr.bf16.mxu0 0
        %352 = vmatpush1.bf16.msra.mxu0 0
        %353 = vmatprep.subr.bf16.mxu0 0
        %354 = vmatpush1.bf16.msra.mxu0 0
        %355 = vmatprep.subr.bf16.mxu0 0
        %356 = vmatpush1.bf16.msra.mxu0 0
        %357 = vmatprep.subr.bf16.mxu0 0
        %358 = vmatpush1.bf16.msra.mxu0 0
        %359 = vmatprep.subr.bf16.mxu0 0
        %360 = vmatpush1.bf16.msra.mxu0 0
        %361 = vmatprep.subr.bf16.mxu0 0
        %362 = vmatpush1.bf16.msra.mxu0 0
        %363 = vmatprep.subr.bf16.mxu0 0
        %364 = vmatpush1.bf16.msra.mxu0 0
        %365 = vmatprep.subr.bf16.mxu0 0
        %366 = vmatpush1.bf16.msra.mxu0 0
        %367 = vmatprep.subr.bf16.mxu0 0
        %368 = vmatpush1.bf16.msra.mxu0 0
        %369 = vmatprep.subr.bf16.mxu0 0
        %370 = vmatpush1.bf16.msra.mxu0 0
        %371 = vmatprep.subr.bf16.mxu0 0
        %372 = vmatpush1.bf16.msra.mxu0 0
        %373 = vmatprep.mubr.bf16.mxu0 0
        %374 = vmatmul.mubr.bf16.gmra.mrb[0].mxu0 %v339
        %v375 = vpop.f32.mrb[0].mxu0
        %v376 = vadd.f32 0.0, %v375
        %v377 = vpop.f32.mrb[0].mxu0
        %v378 = vpop.f32.mrb[0].mxu0
        %v379 = vpop.f32.mrb[0].mxu0
        %380 = vdwg.mxu0
        %v381 = vpack.c.bf16 %v376, %v376
        %383 = vrot.lane.b32.xlu0 %v381, 120
        %v384 = vpop.permute.xlu0 %383
        %vm385 = vcmask 64512
        %v387 = vsel %vm385, %v381, 0
        %v390 = vsel %vm385, %v384, 0
        %392 = vmatprep.subr.bf16.mxu0 0
        %393 = vmatpush1.bf16.xpose.msra.mxu0 %v390
        %394 = vmatprep.subr.bf16.mxu0 0
        %395 = vmatpush1.bf16.xpose.msra.mxu0 0
        %396 = vmatprep.subr.bf16.mxu0 0
        %397 = vmatpush1.bf16.xpose.msra.mxu0 0
        %398 = vmatprep.subr.bf16.mxu0 0
        %399 = vmatpush1.bf16.xpose.msra.mxu0 0
        %400 = vmatprep.subr.bf16.mxu0 0
        %401 = vmatpush1.bf16.xpose.msra.mxu0 0
        %402 = vmatprep.subr.bf16.mxu0 0
        %403 = vmatpush1.bf16.xpose.msra.mxu0 0
        %404 = vmatprep.subr.bf16.mxu0 0
        %405 = vmatpush1.bf16.xpose.msra.mxu0 0
        %406 = vmatprep.subr.bf16.mxu0 0
        %407 = vmatpush1.bf16.xpose.msra.mxu0 0
        %408 = vmatprep.subr.bf16.mxu0 0
        %409 = vmatpush1.bf16.xpose.msra.mxu0 0
        %410 = vmatprep.subr.bf16.mxu0 0
        %411 = vmatpush1.bf16.xpose.msra.mxu0 0
        %412 = vmatprep.subr.bf16.mxu0 0
        %413 = vmatpush1.bf16.xpose.msra.mxu0 0
        %414 = vmatprep.subr.bf16.mxu0 0
        %415 = vmatpush1.bf16.xpose.msra.mxu0 0
        %416 = vmatprep.subr.bf16.mxu0 0
        %417 = vmatpush1.bf16.xpose.msra.mxu0 0
        %418 = vmatprep.subr.bf16.mxu0 0
        %419 = vmatpush1.bf16.xpose.msra.mxu0 0
        %420 = vmatprep.subr.bf16.mxu0 0
        %421 = vmatpush1.bf16.xpose.msra.mxu0 0
        %422 = vmatprep.subr.bf16.mxu0 0
        %423 = vmatpush1.bf16.xpose.msra.mxu0 0
        %424 = vmatprep.mubr.bf16.mxu0 0
        %425 = vmatmul.mubr.bf16.gmra.mrb[0].mxu0 %v387
        %v426 = vpop.f32.mrb[0].mxu0
        %v427 = vadd.f32 0.0, %v426
        %v428 = vpop.f32.mrb[0].mxu0
        %v429 = vpop.f32.mrb[0].mxu0
        %v430 = vpop.f32.mrb[0].mxu0
        %431 = vdwg.mxu0
        %v432 = vsel %vm385, %v427, -inf
        %433 = vmax.xlane.f32.xlu0 %v432
        %v434 = vpop.xlane.xlu0 %433
        %v435 = vsub.f32 %v427, %v434
        %v436 = vmul.f32 %v435, 1.442695
        %v437 = vpow.pop %v436
        %v438 = vsel %vm385, %v437, 0.0
        %439 = vadd.xlane.f32.xlu0 %v438
        %v440 = vpop.xlane.xlu0 %439
        %v441 = vrcp.pop %v440
        %v442 = vmul.f32 %v437, %v441
        %v443 = vpack.c.bf16 %v442, %v442
        %444 = vrot.lane.b32.xlu0 %v381, 112
        %v445 = vpop.permute.xlu0 %444
        %v447 = vsel %vm385, %v443, 0
        %vm449 = vcmask 1043456
        %v451 = vsel %vm449, %v445, 0
        %453 = vmatprep.subr.bf16.mxu0 0
        %454 = vmatpush1.bf16.msra.mxu0 %v451
        %455 = vmatprep.subr.bf16.mxu0 0
        %456 = vmatpush1.bf16.msra.mxu0 0
        %457 = vmatprep.subr.bf16.mxu0 0
        %458 = vmatpush1.bf16.msra.mxu0 0
        %459 = vmatprep.subr.bf16.mxu0 0
        %460 = vmatpush1.bf16.msra.mxu0 0
        %461 = vmatprep.subr.bf16.mxu0 0
        %462 = vmatpush1.bf16.msra.mxu0 0
        %463 = vmatprep.subr.bf16.mxu0 0
        %464 = vmatpush1.bf16.msra.mxu0 0
        %465 = vmatprep.subr.bf16.mxu0 0
        %466 = vmatpush1.bf16.msra.mxu0 0
        %467 = vmatprep.subr.bf16.mxu0 0
        %468 = vmatpush1.bf16.msra.mxu0 0
        %469 = vmatprep.subr.bf16.mxu0 0
        %470 = vmatpush1.bf16.msra.mxu0 0
        %471 = vmatprep.subr.bf16.mxu0 0
        %472 = vmatpush1.bf16.msra.mxu0 0
        %473 = vmatprep.subr.bf16.mxu0 0
        %474 = vmatpush1.bf16.msra.mxu0 0
        %475 = vmatprep.subr.bf16.mxu0 0
        %476 = vmatpush1.bf16.msra.mxu0 0
        %477 = vmatprep.subr.bf16.mxu0 0
        %478 = vmatpush1.bf16.msra.mxu0 0
        %479 = vmatprep.subr.bf16.mxu0 0
        %480 = vmatpush1.bf16.msra.mxu0 0
        %481 = vmatprep.subr.bf16.mxu0 0
        %482 = vmatpush1.bf16.msra.mxu0 0
        %483 = vmatprep.subr.bf16.mxu0 0
        %484 = vmatpush1.bf16.msra.mxu0 0
        %485 = vmatprep.mubr.bf16.mxu0 0
        %486 = vmatmul.mubr.bf16.gmra.mrb[0].mxu0 %v447
        %v487 = vpop.f32.mrb[0].mxu0
        %v488 = vadd.f32 0.0, %v487
        %v489 = vpop.f32.mrb[0].mxu0
        %v490 = vpop.f32.mrb[0].mxu0
        %v491 = vpop.f32.mrb[0].mxu0
        %492 = vdwg.mxu0
        %v493 = vld [vmem:[#allocation2] sm:$0xff]
        %v494 = vpack.c.bf16 %v488, %v488
        %v495 = vld [vmem:[%s305] sm:$0xf]
        %v497 = vsel %vm385, %v494, 0
        %v500 = vsel %vm449, %v495, 0
        %502 = vmatprep.subr.bf16.mxu0 0
        %503 = vmatpush1.bf16.msra.mxu0 %v500
        %504 = vmatprep.subr.bf16.mxu0 0
        %505 = vmatpush1.bf16.msra.mxu0 0
        %506 = vmatprep.subr.bf16.mxu0 0
        %507 = vmatpush1.bf16.msra.mxu0 0
        %508 = vmatprep.subr.bf16.mxu0 0
        %509 = vmatpush1.bf16.msra.mxu0 0
        %510 = vmatprep.subr.bf16.mxu0 0
        %511 = vmatpush1.bf16.msra.mxu0 0
        %512 = vmatprep.subr.bf16.mxu0 0
        %513 = vmatpush1.bf16.msra.mxu0 0
        %514 = vmatprep.subr.bf16.mxu0 0
        %515 = vmatpush1.bf16.msra.mxu0 0
        %516 = vmatprep.subr.bf16.mxu0 0
        %517 = vmatpush1.bf16.msra.mxu0 0
        %518 = vmatprep.subr.bf16.mxu0 0
        %519 = vmatpush1.bf16.msra.mxu0 0
        %520 = vmatprep.subr.bf16.mxu0 0
        %521 = vmatpush1.bf16.msra.mxu0 0
        %522 = vmatprep.subr.bf16.mxu0 0
        %523 = vmatpush1.bf16.msra.mxu0 0
        %524 = vmatprep.subr.bf16.mxu0 0
        %525 = vmatpush1.bf16.msra.mxu0 0
        %526 = vmatprep.subr.bf16.mxu0 0
        %527 = vmatpush1.bf16.msra.mxu0 0
        %528 = vmatprep.subr.bf16.mxu0 0
        %529 = vmatpush1.bf16.msra.mxu0 0
        %530 = vmatprep.subr.bf16.mxu0 0
        %531 = vmatpush1.bf16.msra.mxu0 0
        %532 = vmatprep.subr.bf16.mxu0 0
        %533 = vmatpush1.bf16.msra.mxu0 0
        %534 = vmatprep.mubr.bf16.mxu0 0
        %535 = vmatmul.mubr.bf16.gmra.mrb[0].mxu0 %v497
        %v536 = vpop.f32.mrb[0].mxu0
        %v537 = vadd.f32 0.0, %v536
        %v538 = vpop.f32.mrb[0].mxu0
        %v539 = vpop.f32.mrb[0].mxu0
        %v540 = vpop.f32.mrb[0].mxu0
        %541 = vdwg.mxu0
        %v542 = vadd.f32 %v493, %v537
        %543 = vst.msk [vmem:[#allocation2] sm:$0xff] %vm337, %v542
        %p544 = scmp.eq.s32.totalorder %s26, 3
        // Predicated region
        $region45: #{tpu_custom_call.1} parent=39 // pred_check
          %p545 = pneg %p544
        $region46: #{tpu_custom_call.1} parent=39 // pred_check_branch
          %547 = sbr.rel (%p545) target = $region48
        $region47: #{tpu_custom_call.1} parent=39 // pred_region
          %v548 = vld [vmem:[#allocation2] sm:$0xff]
          %549 = vst.msk [vmem:[%s285] sm:$0xff] %vm337, %v548
        $region48: #{tpu_custom_call.1} parent=39 // pred_fallthru
          _
        %s550 = sand.u32 %s175, 1
        %s551 = scalar_lea.sflag [#allocation4], %s550
        %s552 = sand.u32 %s175, 1
        %s553 = smul.addr %s552, 8
        %s554 = scalar_lea.vmem [#allocation3], %s553
        // Predicated region
        $region49: #{tpu_custom_call.1} parent=39 // pred_check
          %p555 = pneg %p185
        $region50: #{tpu_custom_call.1} parent=39 // pred_check_branch
          %557 = sbr.rel (%p555) target = $region52
        $region51: #{tpu_custom_call.1} parent=39 // pred_region
          %s559 = ssub.s32 128, 128
          %560 = vsyncadd %s551, %s559
          %s561 = sadd.s32 %s25, %s24
          %s562 = smul.addr %s561, 128
          %s563 = scalar_lea.hbm %s5, %s562
          %s565 = sshll.u32 %s554, 4
          %s566 = int_to_ptr.vmem [resolvable:$true] %s565
          %568 = dma.vmem_to_hbm [thread:$0]  %s566, 128, %s563, %s551
        $region52: #{tpu_custom_call.1} parent=39 // pred_fallthru
          _
      $region40: #{tpu_custom_call.1} parent=5 // pred_fallthru
        _
      %p569 = scmp.le.s32.totalorder 2, %s14
      // Predicated region
      $region53: #{tpu_custom_call.1} parent=5 // pred_check
        %p570 = pneg %p569
      $region54: #{tpu_custom_call.1} parent=5 // pred_check_branch
        %572 = sbr.rel (%p570) target = $region56
      $region55: #{tpu_custom_call.1} parent=5 // pred_region
        %s573 = ssub.s32 %s14, 2
        // Predicated region
        $region57: #{tpu_custom_call.1} parent=55 // pred_check
          %p574 = pneg %p191
        $region58: #{tpu_custom_call.1} parent=55 // pred_check_branch
          %576 = sbr.rel (%p574) target = $region60
        $region59: #{tpu_custom_call.1} parent=55 // pred_region
          %s577 = sand.u32 %s176, 1
          %s578 = scalar_lea.sflag [#allocation4], %s577
          %s579 = sand.u32 %s176, 1
          %s580 = smul.addr %s579, 8
          %s581 = scalar_lea.vmem [#allocation3], %s580
          %582 = dma.done %s578, 128
        $region60: #{tpu_custom_call.1} parent=55 // pred_fallthru
          _
      $region56: #{tpu_custom_call.1} parent=5 // pred_fallthru
        _
    $region6: #{tpu_custom_call.1} parent=1 // loop_footer
      %s18 = sadd.s32 1, %s14
    $region7: #{tpu_custom_call.1} parent=1 // loop_footer_branch
      %13 = sbr.rel target = $region3
    $region8: #{tpu_custom_call.1} parent=1 // loop_exit
      _
    %583 = vsyncpa [#allocation4], 1
    %s584 = scalar_lea.sflag [#allocation4], 1
    %585 = vsyncpa %s584, 1

</llo_original>
